<compile_context>
chip_gen: v7x
topology: tpu7x:2x2x1
jax: 0.10.0
libtpu: 0.0.40
codegen_flags: <defaults>
</compile_context>

<pallas_src>
import functools

import jax
import jax.numpy as jnp
from jax.experimental import pallas as pl
from jax.experimental.pallas import tpu as pltpu


def _dice_kernel(pred_ref, tgt_ref, out_ref, inter_ref, union_ref, *,
                 p, num_classes, rows_per_tile, valid_rows, hard_labels,
                 mask_tail):
    s = pl.program_id(1)
    last_s = pl.num_programs(1) - 1

    @pl.when(s == 0)
    def _():
        inter_ref[...] = jnp.zeros_like(inter_ref)
        union_ref[...] = jnp.zeros_like(union_ref)

    def _power(x):
        if p == 1:
            return x
        if p == 2:
            return x * x
        return x ** p

    def _accumulate(masked):
        pred = pred_ref[...].astype(jnp.float32)              # (C, rt, 128)
        if masked:
            row_idx = (s * rows_per_tile
                       + jax.lax.broadcasted_iota(
                           jnp.int32, (rows_per_tile, 128), 0))
            valid = row_idx < valid_rows                       # (rt, 128) bool
            pred = jnp.where(valid[None], pred, 0.0)
        pp = _power(pred)

        if hard_labels:
            tgt = tgt_ref[...]                                 # (rt, 128) int32
            class_ids = jax.lax.broadcasted_iota(
                jnp.int32, (num_classes, rows_per_tile, 128), 0)
            onehot = tgt[None] == class_ids                    # (C, rt, 128) bool
            if masked:
                onehot = jnp.logical_and(onehot, valid[None])
            inter_tile = jnp.where(onehot, pred, 0.0)
            union_tile = pp + jnp.where(onehot, 1.0, 0.0)      # onehot**p == onehot
        else:
            tgt = tgt_ref[...].astype(jnp.float32)             # (C, rt, 128)
            if masked:
                tgt = jnp.where(valid[None], tgt, 0.0)
            inter_tile = pred * tgt
            union_tile = pp + _power(tgt)

        # Collapse the big tile to a (C, 1, 128) partial before touching the
        # VMEM accumulators (keeps the per-step scratch traffic tiny).
        inter_ref[...] += jnp.sum(inter_tile, axis=1, keepdims=True)
        union_ref[...] += jnp.sum(union_tile, axis=1, keepdims=True)

    if mask_tail:
        # Pay the masking VPU cost only on the final (partial) spatial step.
        @pl.when(s < last_s)
        def _():
            _accumulate(masked=False)

        @pl.when(s == last_s)
        def _():
            _accumulate(masked=True)
    else:
        _accumulate(masked=False)

    @pl.when(s == last_s)
    def _():
        out_ref[0] = jnp.sum(inter_ref[...], axis=1)           # (C, 128)
        out_ref[1] = jnp.sum(union_ref[...], axis=1)           # (C, 128)


def dice_loss(predictions, targets, per_class_loss_weight=None, *,
              smooth=1.0, p=2, gamma=1.0, rows_per_tile=1024):
    """Pallas implementation of DiceLoss.forward.

    predictions: (N, C, H, W) float (any float dtype; accumulation is f32)
    targets:     (N, H, W) int (hard labels) or (N, C, H, W) float (soft labels)
    """
    N, C, H, W = predictions.shape
    L = H * W

    if targets.ndim == 3:
        hard = True
    elif targets.ndim == 4:
        hard = False
    else:
        raise ValueError("Target shape not supported. Expected 3D or 4D tensor.")

    if per_class_loss_weight is None:
        per_class_loss_weight = [1.0, 1.0]        # module default (C == 2)
    if len(per_class_loss_weight) != C:
        raise ValueError("per_class_loss_weight must have one entry per class.")
    w = jnp.asarray(per_class_loss_weight, dtype=jnp.float32)   # (C,)

    pred = predictions.reshape(N, C, L)           # view-only reshape
    if hard:
        tgt = targets.astype(jnp.int32).reshape(N, L)
    else:
        tgt = targets.reshape(N, C, L)

    # Lane-align the flattened spatial dim to 128 (copy emitted only when
    # H*W is not a multiple of 128).  Pad values are neutral: pred = 0,
    # hard label = C (matches no class), soft target = 0.
    # TODO(synk): fold the lane tail into the in-kernel mask (flat-index
    # masking on an unreshaped (N, C, L) layout) to make this path copy-free.
    R = pl.cdiv(L, 128)
    L128 = R * 128
    if L128 != L:
        pad = L128 - L
        pred = jnp.pad(pred, ((0, 0), (0, 0), (0, pad)))
        if hard:
            tgt = jnp.pad(tgt, ((0, 0), (0, pad)), constant_values=C)
        else:
            tgt = jnp.pad(tgt, ((0, 0), (0, 0), (0, pad)))

    pred = pred.reshape(N, C, R, 128)
    tgt = tgt.reshape(N, R, 128) if hard else tgt.reshape(N, C, R, 128)

    # Row-tile sizing: as large as a double-buffered VMEM budget allows
    # (the accumulators are only (C, 1, 128), so the input blocks dominate),
    # 8-aligned, capped by the user-supplied rows_per_tile.
    pred_bpr = C * 128 * pred.dtype.itemsize
    tgt_bpr = 128 * tgt.dtype.itemsize if hard else C * 128 * tgt.dtype.itemsize
    vmem_budget = 12 * 1024 * 1024                # for 2x double-buffered inputs
    max_rows = max(8, ((vmem_budget // (2 * (pred_bpr + tgt_bpr))) // 8) * 8)
    rt_req = max(8, (min(int(rows_per_tile), max_rows) // 8) * 8)
    if R <= rt_req:
        rt = R                    # full extent (allowed even if not 8-aligned)
        n_s = 1
        mask_tail = False
    else:
        rt = rt_req
        n_s = pl.cdiv(R, rt)
        mask_tail = (R % rt) != 0

    kernel = functools.partial(
        _dice_kernel, p=int(p), num_classes=C, rows_per_tile=rt,
        valid_rows=R, hard_labels=hard, mask_tail=mask_tail)

    if hard:
        tgt_spec = pl.BlockSpec((None, rt, 128), lambda n, s: (n, s, 0))
    else:
        tgt_spec = pl.BlockSpec((None, C, rt, 128), lambda n, s: (n, 0, s, 0))

    partials = pl.pallas_call(
        kernel,
        out_shape=jax.ShapeDtypeStruct((N, 2, C, 128), jnp.float32),
        grid_spec=pltpu.PrefetchScalarGridSpec(
            num_scalar_prefetch=0,
            grid=(N, n_s),
            in_specs=[
                pl.BlockSpec((None, C, rt, 128), lambda n, s: (n, 0, s, 0)),
                tgt_spec,
            ],
            out_specs=pl.BlockSpec((None, 2, C, 128), lambda n, s: (n, 0, 0, 0)),
            scratch_shapes=[
                pltpu.VMEM((C, 1, 128), jnp.float32),   # intersection partial
                pltpu.VMEM((C, 1, 128), jnp.float32),   # union partial
            ],
        ),
        # Each n writes its own output block and resets its accumulators, so
        # the batch axis is parallel (2-TC split on v7x); the spatial
        # reduction axis stays sequential.
        compiler_params=pltpu.CompilerParams(
            dimension_semantics=("parallel", "arbitrary"),
            vmem_limit_bytes=32 * 1024 * 1024),
    )(pred, tgt)

    # Tiny dice / focal / weight / mean epilogue in plain JAX.
    inter = jnp.sum(partials[:, 0, :, :], axis=(0, 2))          # (C,)
    union = jnp.sum(partials[:, 1, :, :], axis=(0, 2))          # (C,)
    dice = (2.0 * inter + smooth) / (union + smooth)
    loss = 1.0 - dice
    if abs(float(gamma) - 1.0) > 1e-8:
        # Matches torch.pow: exact for loss >= 0 (guaranteed for p == 2 by
        # AM-GM); NaN for loss < 0 (only possible for p == 1 with raw logits).
        loss = loss ** (1.0 / gamma)
    return jnp.mean(loss * w)


def _dice_loss_ref(predictions, targets, weights, smooth=1.0, p=2, gamma=1.0):
    """Pure-JAX reference mirroring the PyTorch forward."""
    predictions = predictions.astype(jnp.float32)
    N, C, H, W = predictions.shape
    pr = jnp.transpose(predictions, (1, 0, 2, 3)).reshape(C, -1)
    if targets.ndim == 3:
        tg = jnp.transpose(jax.nn.one_hot(targets, C, dtype=jnp.float32),
                           (3, 0, 1, 2)).reshape(C, -1)
    else:
        tg = jnp.transpose(targets.astype(jnp.float32), (1, 0, 2, 3)).reshape(C, -1)
    inter = jnp.sum(pr * tg, axis=1)
    union = jnp.sum(pr ** p + tg ** p, axis=1)
    dice = (2.0 * inter + smooth) / (union + smooth)
    loss = 1.0 - dice
    if abs(gamma - 1.0) > 1e-8:
        loss = loss ** (1.0 / gamma)
    return jnp.mean(loss * jnp.asarray(weights, dtype=jnp.float32))


if __name__ == "__main__":
    key = jax.random.PRNGKey(0)
    k1, k2, k3, k4, k5 = jax.random.split(key, 5)

    # 1) Hard labels, defaults (C=2 matches per_class_loss_weight=[1.0, 1.0]).
    N, C, H, W = 2, 2, 16, 16
    preds = jax.random.normal(k1, (N, C, H, W), dtype=jnp.float32)
    tgts = jax.random.randint(k2, (N, H, W), 0, C, dtype=jnp.int32)
    out = jax.block_until_ready(dice_loss(preds, tgts, [1.0, 1.0],
                                          smooth=1.0, p=2, gamma=1.0))
    ref = _dice_loss_ref(preds, tgts, [1.0, 1.0], smooth=1.0, p=2, gamma=1.0)
    assert jnp.allclose(out, ref, rtol=1e-5, atol=1e-5), ("hard", out, ref)

    # 2) Soft labels (4D float targets).
    soft_tgts = jax.nn.softmax(
        jax.random.normal(k3, (N, C, H, W), dtype=jnp.float32), axis=1)
    out = jax.block_until_ready(dice_loss(preds, soft_tgts, [1.0, 1.0]))
    ref = _dice_loss_ref(preds, soft_tgts, [1.0, 1.0])
    assert jnp.allclose(out, ref, rtol=1e-5, atol=1e-5), ("soft", out, ref)

    # 3) Multi-tile grid with a masked tail step, focal gamma, C=3, weights.
    N2, C2, H2, W2 = 2, 3, 48, 48
    probs = jax.nn.softmax(
        jax.random.normal(k4, (N2, C2, H2, W2), dtype=jnp.float32), axis=1)
    tgts2 = jax.random.randint(k5, (N2, H2, W2), 0, C2, dtype=jnp.int32)
    wts = [0.5, 1.0, 1.5]
    out = jax.block_until_ready(
        dice_loss(probs, tgts2, wts, smooth=1.0, p=2, gamma=2.0, rows_per_tile=8))
    ref = _dice_loss_ref(probs, tgts2, wts, smooth=1.0, p=2, gamma=2.0)
    assert jnp.allclose(out, ref, rtol=1e-5, atol=1e-5), ("focal", out, ref)

    print("KERNEL_OK")
</pallas_src>

<mosaic_0001>
module attributes {stable_mosaic.version = 11 : i64} {
  func.func @_dice_kernel(%arg0: i32, %arg1: i32, %arg2: memref<1x2x2x128xf32, #tpu.memory_space<vmem>>, %arg3: memref<1x2x128xi32, #tpu.memory_space<vmem>>, %arg4: memref<1x2x2x128xf32, #tpu.memory_space<vmem>>, %arg5: memref<2x1x128xf32, #tpu.memory_space<vmem>>, %arg6: memref<2x1x128xf32, #tpu.memory_space<vmem>>) attributes {dimension_semantics = [#tpu.dimension_semantics<parallel>, #tpu.dimension_semantics<arbitrary>], iteration_bounds = array<i64: 2, 1>, scalar_prefetch = 0 : i64, scratch_operands = 2 : i64, tpu.core_type = #tpu.core_type<tc>, window_params = [{transform_indices = @transform_0, window_bounds = array<i64: 1, 2, 2, 128>}, {transform_indices = @transform_1, window_bounds = array<i64: 1, 2, 128>}, {transform_indices = @transform_2, window_bounds = array<i64: 1, 2, 2, 128>}]} {
    %c0_i32 = arith.constant 0 : i32
    %0 = arith.cmpi eq, %arg1, %c0_i32 : i32
    %1 = arith.extui %0 : i1 to i32
    %c0_i32_0 = arith.constant 0 : i32
    %2 = arith.cmpi ne, %1, %c0_i32_0 : i32
    scf.if %2 {
      %cst_25 = arith.constant 0.000000e+00 : f32
      %31 = vector.broadcast %cst_25 : f32 to vector<2x1x128xf32>
      %c0_26 = arith.constant 0 : index
      %c0_27 = arith.constant 0 : index
      %c0_28 = arith.constant 0 : index
      %32 = vector.load %arg5[%c0_26, %c0_27, %c0_28] : memref<2x1x128xf32, #tpu.memory_space<vmem>>, vector<2x1x128xf32>
      tpu.vector_store %arg5[%c0_26, %c0_27, %c0_28], %31 {strides = array<i32>} : memref<2x1x128xf32, #tpu.memory_space<vmem>>, vector<2x1x128xf32>,
      %cst_29 = arith.constant 0.000000e+00 : f32
      %33 = vector.broadcast %cst_29 : f32 to vector<2x1x128xf32>
      %c0_30 = arith.constant 0 : index
      %c0_31 = arith.constant 0 : index
      %c0_32 = arith.constant 0 : index
      %34 = vector.load %arg6[%c0_30, %c0_31, %c0_32] : memref<2x1x128xf32, #tpu.memory_space<vmem>>, vector<2x1x128xf32>
      tpu.vector_store %arg6[%c0_30, %c0_31, %c0_32], %33 {strides = array<i32>} : memref<2x1x128xf32, #tpu.memory_space<vmem>>, vector<2x1x128xf32>,
    } else {
    }
    %c0 = arith.constant 0 : index
    %c0_1 = arith.constant 0 : index
    %c0_2 = arith.constant 0 : index
    %c0_3 = arith.constant 0 : index
    %3 = vector.load %arg2[%c0, %c0_1, %c0_2, %c0_3] : memref<1x2x2x128xf32, #tpu.memory_space<vmem>>, vector<1x2x2x128xf32>
    %4 = vector.shape_cast %3 : vector<1x2x2x128xf32> to vector<2x2x128xf32>
    %5 = arith.mulf %4, %4 : vector<2x2x128xf32>
    %c0_4 = arith.constant 0 : index
    %c0_5 = arith.constant 0 : index
    %c0_6 = arith.constant 0 : index
    %6 = vector.load %arg3[%c0_4, %c0_5, %c0_6] : memref<1x2x128xi32, #tpu.memory_space<vmem>>, vector<1x2x128xi32>
    %7 = vector.shape_cast %6 : vector<1x2x128xi32> to vector<2x128xi32>
    %8 = tpu.iota {dimensions = array<i32: 0>} : vector<2x2x128xi32>
    %9 = vector.shape_cast %7 : vector<2x128xi32> to vector<1x2x128xi32>
    %10 = vector.broadcast %9 : vector<1x2x128xi32> to vector<2x2x128xi32>
    %11 = arith.cmpi eq, %10, %8 : vector<2x2x128xi32>
    %cst = arith.constant 0.000000e+00 : f32
    %12 = vector.broadcast %cst : f32 to vector<2x2x128xf32>
    %13 = arith.select %11, %4, %12 : vector<2x2x128xi1>, vector<2x2x128xf32>
    %cst_7 = arith.constant 1.000000e+00 : f32
    %cst_8 = arith.constant 0.000000e+00 : f32
    %14 = vector.broadcast %cst_7 : f32 to vector<2x2x128xf32>
    %15 = vector.broadcast %cst_8 : f32 to vector<2x2x128xf32>
    %16 = arith.select %11, %14, %15 : vector<2x2x128xi1>, vector<2x2x128xf32>
    %17 = arith.addf %5, %16 : vector<2x2x128xf32>
    %c0_9 = arith.constant 0 : index
    %c0_10 = arith.constant 0 : index
    %c0_11 = arith.constant 0 : index
    %18 = vector.load %arg5[%c0_9, %c0_10, %c0_11] : memref<2x1x128xf32, #tpu.memory_space<vmem>>, vector<2x1x128xf32>
    %cst_12 = arith.constant dense<0.000000e+00> : vector<2x128xf32>
    %19 = vector.multi_reduction <add>, %13, %cst_12 [1] : vector<2x2x128xf32> to vector<2x128xf32>
    %20 = vector.shape_cast %19 : vector<2x128xf32> to vector<2x1x128xf32>
    %21 = arith.addf %18, %20 : vector<2x1x128xf32>
    %c0_13 = arith.constant 0 : index
    %c0_14 = arith.constant 0 : index
    %c0_15 = arith.constant 0 : index
    %22 = vector.load %arg5[%c0_13, %c0_14, %c0_15] : memref<2x1x128xf32, #tpu.memory_space<vmem>>, vector<2x1x128xf32>
    tpu.vector_store %arg5[%c0_13, %c0_14, %c0_15], %21 {strides = array<i32>} : memref<2x1x128xf32, #tpu.memory_space<vmem>>, vector<2x1x128xf32>,
    %c0_16 = arith.constant 0 : index
    %c0_17 = arith.constant 0 : index
    %c0_18 = arith.constant 0 : index
    %23 = vector.load %arg6[%c0_16, %c0_17, %c0_18] : memref<2x1x128xf32, #tpu.memory_space<vmem>>, vector<2x1x128xf32>
    %cst_19 = arith.constant dense<0.000000e+00> : vector<2x128xf32>
    %24 = vector.multi_reduction <add>, %17, %cst_19 [1] : vector<2x2x128xf32> to vector<2x128xf32>
    %25 = vector.shape_cast %24 : vector<2x128xf32> to vector<2x1x128xf32>
    %26 = arith.addf %23, %25 : vector<2x1x128xf32>
    %c0_20 = arith.constant 0 : index
    %c0_21 = arith.constant 0 : index
    %c0_22 = arith.constant 0 : index
    %27 = vector.load %arg6[%c0_20, %c0_21, %c0_22] : memref<2x1x128xf32, #tpu.memory_space<vmem>>, vector<2x1x128xf32>
    tpu.vector_store %arg6[%c0_20, %c0_21, %c0_22], %26 {strides = array<i32>} : memref<2x1x128xf32, #tpu.memory_space<vmem>>, vector<2x1x128xf32>,
    %c0_i32_23 = arith.constant 0 : i32
    %28 = arith.cmpi eq, %arg1, %c0_i32_23 : i32
    %29 = arith.extui %28 : i1 to i32
    %c0_i32_24 = arith.constant 0 : i32
    %30 = arith.cmpi ne, %29, %c0_i32_24 : i32
    scf.if %30 {
      %c0_25 = arith.constant 0 : index
      %c0_26 = arith.constant 0 : index
      %c0_27 = arith.constant 0 : index
      %31 = vector.load %arg5[%c0_25, %c0_26, %c0_27] : memref<2x1x128xf32, #tpu.memory_space<vmem>>, vector<2x1x128xf32>
      %cst_28 = arith.constant dense<0.000000e+00> : vector<2x128xf32>
      %32 = vector.multi_reduction <add>, %31, %cst_28 [1] : vector<2x1x128xf32> to vector<2x128xf32>
      %c0_29 = arith.constant 0 : index
      %c0_30 = arith.constant 0 : index
      %c0_31 = arith.constant 0 : index
      %c0_32 = arith.constant 0 : index
      %33 = vector.load %arg4[%c0_29, %c0_30, %c0_31, %c0_32] : memref<1x2x2x128xf32, #tpu.memory_space<vmem>>, vector<1x1x2x128xf32>
      %34 = vector.shape_cast %33 : vector<1x1x2x128xf32> to vector<2x128xf32>
      %35 = vector.shape_cast %32 : vector<2x128xf32> to vector<1x1x2x128xf32>
      tpu.vector_store %arg4[%c0_29, %c0_30, %c0_31, %c0_32], %35 {strides = array<i32>} : memref<1x2x2x128xf32, #tpu.memory_space<vmem>>, vector<1x1x2x128xf32>,
      %c0_33 = arith.constant 0 : index
      %c0_34 = arith.constant 0 : index
      %c0_35 = arith.constant 0 : index
      %36 = vector.load %arg6[%c0_33, %c0_34, %c0_35] : memref<2x1x128xf32, #tpu.memory_space<vmem>>, vector<2x1x128xf32>
      %cst_36 = arith.constant dense<0.000000e+00> : vector<2x128xf32>
      %37 = vector.multi_reduction <add>, %36, %cst_36 [1] : vector<2x1x128xf32> to vector<2x128xf32>
      %c0_37 = arith.constant 0 : index
      %c1 = arith.constant 1 : index
      %c0_38 = arith.constant 0 : index
      %c0_39 = arith.constant 0 : index
      %38 = vector.load %arg4[%c0_37, %c1, %c0_38, %c0_39] : memref<1x2x2x128xf32, #tpu.memory_space<vmem>>, vector<1x1x2x128xf32>
      %39 = vector.shape_cast %38 : vector<1x1x2x128xf32> to vector<2x128xf32>
      %40 = vector.shape_cast %37 : vector<2x128xf32> to vector<1x1x2x128xf32>
      tpu.vector_store %arg4[%c0_37, %c1, %c0_38, %c0_39], %40 {strides = array<i32>} : memref<1x2x2x128xf32, #tpu.memory_space<vmem>>, vector<1x1x2x128xf32>,
    } else {
    }
    return
  }
  func.func @transform_0(%arg0: i32, %arg1: i32) -> (i32, i32, i32, i32) {
    %c0_i32 = arith.constant 0 : i32
    %c0_i32_0 = arith.constant 0 : i32
    %c0_i32_1 = arith.constant 0 : i32
    return %arg0, %c0_i32, %arg1, %c0_i32_0 : i32, i32, i32, i32
  }
  func.func @transform_1(%arg0: i32, %arg1: i32) -> (i32, i32, i32) {
    %c0_i32 = arith.constant 0 : i32
    %c0_i32_0 = arith.constant 0 : i32
    return %arg0, %arg1, %c0_i32 : i32, i32, i32
  }
  func.func @transform_2(%arg0: i32, %arg1: i32) -> (i32, i32, i32, i32) {
    %c0_i32 = arith.constant 0 : i32
    %c0_i32_0 = arith.constant 0 : i32
    %c0_i32_1 = arith.constant 0 : i32
    %c0_i32_2 = arith.constant 0 : i32
    return %arg0, %c0_i32, %c0_i32_0, %c0_i32_1 : i32, i32, i32, i32
  }
}

</mosaic_0001>

<llo_original>
// kernel: tpu_custom_call.1
$region0: #{tpu_custom_call.1}
  #allocation0 [shape = 'u32[]', space=smem, size = 0x4, offset = 0x4, fixed_abs, tag = 'smem constant byte address 0x4 - core index']
  #allocation1 [shape = 'u32[144,128]{1,0:T(1,128)}', space=vmem, size = 0x12000, scoped, tag = 'internal scratch']
  #allocation2 [shape = 'f32[2,1,128]{2,1,0:T(1,128)}', space=vmem, size = 0x400, scoped, tag = 'scratch operand']
  #allocation3 [shape = 'f32[2,1,128]{2,1,0:T(1,128)}', space=vmem, size = 0x400, scoped, tag = 'scratch operand']
  %s0 = inlined_call_operand.hbm [shape: f32[2,2,2,128], index: 0, kind: input, shape index: {}]
  %s1 = inlined_call_operand.hbm [shape: s32[2,2,128], index: 1, kind: input, shape index: {}]
  %s2 = inlined_call_operand.hbm [shape: f32[2,2,2,128], index: 2, kind: output, shape index: {}]
  %s3 = sld [smem:[#allocation0]]
  $region57: #{tpu_custom_call.1} parent=0
    _
  %s5 = ssub.s32 1, %s3
  %s6 = scalar_select 0, %s5, %s3
  $region1: #{tpu_custom_call.1} parent=0
    #allocation4 [shape = 'u8[4096]{0}', space=vmem, size = 0x1000, scoped, tag = 'input window, operand 0']
    #allocation5 [shape = 's32[2]{0}', space=sflag, size = 0x8, scoped, tag = 'scoped memory for tpu_custom_call.1']
    #allocation6 [shape = 's32[2]{0}', space=sflag, size = 0x8, scoped, tag = 'scoped memory for tpu_custom_call.1']
    #allocation7 [shape = 'u8[2048]{0}', space=vmem, size = 0x800, scoped, tag = 'input window, operand 1']
    #allocation8 [shape = 's32[2]{0}', space=sflag, size = 0x8, scoped, tag = 'scoped memory for tpu_custom_call.1']
    #allocation9 [shape = 'u8[4096]{0}', space=vmem, size = 0x1000, scoped, tag = 'output window, operand 0']
    %7 = vsyncpa [#allocation5], 0
    %s8 = scalar_lea.sflag [#allocation5], 1
    %9 = vsyncpa %s8, 0
    %10 = vsyncpa [#allocation8], 0
    %s11 = scalar_lea.sflag [#allocation8], 1
    %12 = vsyncpa %s11, 0
    %13 = vsyncpa [#allocation6], 0
    %s14 = scalar_lea.sflag [#allocation6], 1
    %15 = vsyncpa %s14, 0
    loop: start=0, step=1, limit=4
    $region2: #{tpu_custom_call.1} parent=1 // loop_pre_header
      _
    $region3: #{tpu_custom_call.1} parent=1 // loop_header
      %s17 = sphi 0, %s21
      %p18 = scmp.ge.s32.totalorder %s17, 4
      %s24 = sphi 0, %s36
      %s25 = sphi 0, %s32
      %s26 = sphi 0, %s24
      %s27 = sphi 0, %s25
      %s28 = sphi 0, %s26
      %s29 = sphi 0, %s27
      %s41 = sphi 0, %s43
      %s44 = sphi 0, %s41
      %s45 = sphi 0, %s44
      %s61 = sphi 0, %s45
      %s69 = sphi 0, %s71
      %s72 = sphi 0, %s69
      %s73 = sphi 0, %s72
      %s89 = sphi 0, %s73
      %s95 = sphi 0, %s97
      %s98 = sphi 0, %s95
      %s99 = sphi 0, %s98
      %s115 = sphi 0, %s99
    $region4: #{tpu_custom_call.1} parent=1 // loop_header_branch
      %20 = sbr.rel (%p18) target = $region8
    $region5: #{tpu_custom_call.1} parent=1 // loop_body
      %s22 = ssub.s32 %s17, 1
      %s23 = ssub.s32 %s17, 2
      %s30 = sadd.s32 1, %s25
      %p31 = scmp.ge.s32.totalorder %s30, 1
      %s32 = scalar_select %p31, 0, %s30
      %s33 = sadd.s32 1, %s24
      %s34 = scalar_select %p31, %s33, %s24
      %p35 = scmp.ge.s32.totalorder %s34, 2
      %s36 = scalar_select %p35, 0, %s34
      %s37 = ssub.s32 %s24, %s36
      %s38 = ssub.s32 %s25, %s32
      %s39 = sor.u32 %s37, %s38
      %p40 = scmp.eq.s32.totalorder %s39, 0
      %s42 = sadd.s32 %s41, 1
      %s43 = scalar_select %p40, %s41, %s42
      %p46 = pneg %p40
      %p47 = scmp.eq.s32.totalorder %s17, 1
      %p48 = por %p46, %p47
      %p49 = scmp.ne.s32.totalorder %s41, %s44
      %p50 = scmp.eq.s32.totalorder %s17, 0
      %p51 = por %p49, %p50
      %p52 = scmp.ne.s32.totalorder %s41, %s44
      %p53 = scmp.eq.s32.totalorder %s22, 1
      %p54 = por %p52, %p53
      %p55 = scmp.ne.s32.totalorder %s44, %s45
      %p56 = scmp.eq.s32.totalorder %s22, 0
      %p57 = por %p55, %p56
      %p58 = scmp.ne.s32.totalorder %s44, %s45
      %p59 = scmp.eq.s32.totalorder %s23, 1
      %p60 = por %p58, %p59
      %p62 = scmp.ne.s32.totalorder %s45, %s61
      %p63 = scmp.eq.s32.totalorder %s23, 0
      %p64 = por %p62, %p63
      %s65 = ssub.s32 %s24, %s36
      %s66 = ssub.s32 %s25, %s32
      %s67 = sor.u32 %s65, %s66
      %p68 = scmp.eq.s32.totalorder %s67, 0
      %s70 = sadd.s32 %s69, 1
      %s71 = scalar_select %p68, %s69, %s70
      %p74 = pneg %p68
      %p75 = scmp.eq.s32.totalorder %s17, 1
      %p76 = por %p74, %p75
      %p77 = scmp.ne.s32.totalorder %s69, %s72
      %p78 = scmp.eq.s32.totalorder %s17, 0
      %p79 = por %p77, %p78
      %p80 = scmp.ne.s32.totalorder %s69, %s72
      %p81 = scmp.eq.s32.totalorder %s22, 1
      %p82 = por %p80, %p81
      %p83 = scmp.ne.s32.totalorder %s72, %s73
      %p84 = scmp.eq.s32.totalorder %s22, 0
      %p85 = por %p83, %p84
      %p86 = scmp.ne.s32.totalorder %s72, %s73
      %p87 = scmp.eq.s32.totalorder %s23, 1
      %p88 = por %p86, %p87
      %p90 = scmp.ne.s32.totalorder %s73, %s89
      %p91 = scmp.eq.s32.totalorder %s23, 0
      %p92 = por %p90, %p91
      %s93 = ssub.s32 %s24, %s36
      %p94 = scmp.eq.s32.totalorder %s93, 0
      %s96 = sadd.s32 %s95, 1
      %s97 = scalar_select %p94, %s95, %s96
      %p100 = pneg %p94
      %p101 = scmp.eq.s32.totalorder %s17, 1
      %p102 = por %p100, %p101
      %p103 = scmp.ne.s32.totalorder %s95, %s98
      %p104 = scmp.eq.s32.totalorder %s17, 0
      %p105 = por %p103, %p104
      %p106 = scmp.ne.s32.totalorder %s95, %s98
      %p107 = scmp.eq.s32.totalorder %s22, 1
      %p108 = por %p106, %p107
      %p109 = scmp.ne.s32.totalorder %s98, %s99
      %p110 = scmp.eq.s32.totalorder %s22, 0
      %p111 = por %p109, %p110
      %p112 = scmp.ne.s32.totalorder %s98, %s99
      %p113 = scmp.eq.s32.totalorder %s23, 1
      %p114 = por %p112, %p113
      %p116 = scmp.ne.s32.totalorder %s99, %s115
      %p117 = scmp.eq.s32.totalorder %s23, 0
      %p118 = por %p116, %p117
      %p119 = scmp.le.s32.totalorder 1, %s17
      %p120 = scmp.lt.s32.totalorder %s17, 3
      %p121 = pnand %p119, %p120
      %p122 = pneg %p121
      // Predicated region
      $region9: #{tpu_custom_call.1} parent=5 // pred_check
        _
      $region10: #{tpu_custom_call.1} parent=5 // pred_check_branch
        %124 = sbr.rel (%p121) target = $region12
      $region11: #{tpu_custom_call.1} parent=5 // pred_region
        %s125 = ssub.s32 %s17, 1
      $region12: #{tpu_custom_call.1} parent=5 // pred_fallthru
        _
      %p126 = scmp.lt.s32.totalorder %s17, 2
      // Predicated region
      $region13: #{tpu_custom_call.1} parent=5 // pred_check
        %p127 = pneg %p126
      $region14: #{tpu_custom_call.1} parent=5 // pred_check_branch
        %129 = sbr.rel (%p127) target = $region16
      $region15: #{tpu_custom_call.1} parent=5 // pred_region
        // Predicated region
        $region17: #{tpu_custom_call.1} parent=15 // pred_check
          %p130 = pneg %p51
        $region18: #{tpu_custom_call.1} parent=15 // pred_check_branch
          %132 = sbr.rel (%p130) target = $region20
        $region19: #{tpu_custom_call.1} parent=15 // pred_region
          %s133 = sand.u32 %s41, 1
          %s134 = scalar_lea.sflag [#allocation5], %s133
          %s135 = sand.u32 %s41, 1
          %s136 = smul.addr %s135, 4
          %s137 = scalar_lea.vmem [#allocation4], %s136
          %s139 = ssub.s32 64, 64
          %140 = vsyncadd %s134, %s139
          %s141 = smul.addr %s24, 2
          %s142 = sadd.s32 %s25, %s141
          %s143 = smul.addr %s142, 32
          %s144 = scalar_lea.hbm %s0, %s143
          %s145 = sshll.u32 %s137, 4
          %s146 = int_to_ptr.vmem [resolvable:$true] %s145
          %151 = dma.hbm_to_vmem [thread:$0]  %s144, 64, %s146, %s134, 32, 32, 2
        $region20: #{tpu_custom_call.1} parent=15 // pred_fallthru
          _
        // Predicated region
        $region21: #{tpu_custom_call.1} parent=15 // pred_check
          %p152 = pneg %p79
        $region22: #{tpu_custom_call.1} parent=15 // pred_check_branch
          %154 = sbr.rel (%p152) target = $region24
        $region23: #{tpu_custom_call.1} parent=15 // pred_region
          %s155 = sand.u32 %s69, 1
          %s156 = scalar_lea.sflag [#allocation8], %s155
          %s157 = sand.u32 %s69, 1
          %s158 = smul.addr %s157, 2
          %s159 = scalar_lea.vmem [#allocation7], %s158
          %s161 = ssub.s32 32, 32
          %162 = vsyncadd %s156, %s161
          %s163 = sadd.s32 %s25, %s24
          %s164 = smul.addr %s163, 32
          %s165 = scalar_lea.hbm %s1, %s164
          %s167 = sshll.u32 %s159, 4
          %s168 = int_to_ptr.vmem [resolvable:$true] %s167
          %170 = dma.hbm_to_vmem [thread:$0]  %s165, 32, %s168, %s156
        $region24: #{tpu_custom_call.1} parent=15 // pred_fallthru
          _
      $region16: #{tpu_custom_call.1} parent=5 // pred_fallthru
        _
      %p171 = scmp.le.s32.totalorder 1, %s17
      %p172 = scmp.lt.s32.totalorder %s17, 3
      %p173 = pnand %p171, %p172
      %p174 = pneg %p173
      // Predicated region
      $region25: #{tpu_custom_call.1} parent=5 // pred_check
        _
      $region26: #{tpu_custom_call.1} parent=5 // pred_check_branch
        %176 = sbr.rel (%p173) target = $region28
      $region27: #{tpu_custom_call.1} parent=5 // pred_region
        %s177 = ssub.s32 %s17, 1
        %s178 = sand.u32 %s44, 1
        %s179 = scalar_lea.sflag [#allocation5], %s178
        %s180 = sand.u32 %s44, 1
        %s181 = smul.addr %s180, 4
        %s182 = scalar_lea.vmem [#allocation4], %s181
        // Predicated region
        $region29: #{tpu_custom_call.1} parent=27 // pred_check
          %p183 = pneg %p57
        $region30: #{tpu_custom_call.1} parent=27 // pred_check_branch
          %185 = sbr.rel (%p183) target = $region32
        $region31: #{tpu_custom_call.1} parent=27 // pred_region
          %186 = dma.done %s179, 64
        $region32: #{tpu_custom_call.1} parent=27 // pred_fallthru
          _
        %s187 = sand.u32 %s72, 1
        %s188 = scalar_lea.sflag [#allocation8], %s187
        %s189 = sand.u32 %s72, 1
        %s190 = smul.addr %s189, 2
        %s191 = scalar_lea.vmem [#allocation7], %s190
        // Predicated region
        $region33: #{tpu_custom_call.1} parent=27 // pred_check
          %p192 = pneg %p85
        $region34: #{tpu_custom_call.1} parent=27 // pred_check_branch
          %194 = sbr.rel (%p192) target = $region36
        $region35: #{tpu_custom_call.1} parent=27 // pred_region
          %195 = dma.done %s188, 32
        $region36: #{tpu_custom_call.1} parent=27 // pred_fallthru
          _
        %s196 = sand.u32 %s44, 1
        %s197 = scalar_lea.sflag [#allocation5], %s196
        %s198 = sand.u32 %s44, 1
        %s199 = smul.addr %s198, 4
        %s200 = scalar_lea.vmem [#allocation4], %s199
        %p201 = pneg %p57
        %p202 = pneg %p54
        %s203 = sand.u32 %s72, 1
        %s204 = scalar_lea.sflag [#allocation8], %s203
        %s205 = sand.u32 %s72, 1
        %s206 = smul.addr %s205, 2
        %s207 = scalar_lea.vmem [#allocation7], %s206
        %p208 = pneg %p85
        %p209 = pneg %p82
        %p210 = pneg %p111
        %p211 = pneg %p108
        %s212 = sand.u32 %s98, 1
        %s213 = scalar_lea.sflag [#allocation6], %s212
        %s214 = sand.u32 %s98, 1
        %s215 = smul.addr %s214, 4
        %s216 = scalar_lea.vmem [#allocation9], %s215
        %p217 = scmp.eq.s32.totalorder %s27, 0
        // Predicated region
        $region37: #{tpu_custom_call.1} parent=27 // pred_check
          %p218 = pneg %p217
        $region38: #{tpu_custom_call.1} parent=27 // pred_check_branch
          %220 = sbr.rel (%p218) target = $region40
        $region39: #{tpu_custom_call.1} parent=27 // pred_region
          %221 = vst [vmem:[#allocation2] sm:$0x1] 0.0
          %222 = vst [vmem:[#allocation2 + $0x1] sm:$0x1] 0.0
          %223 = vst [vmem:[#allocation3] sm:$0x1] 0.0
          %224 = vst [vmem:[#allocation3 + $0x1] sm:$0x1] 0.0
        $region40: #{tpu_custom_call.1} parent=27 // pred_fallthru
          _
        %v225 = vld [vmem:[%s182] sm:$0x3]
        %v226 = vld [vmem:[%s182 + $0x2] sm:$0x3]
        %v227 = vmul.f32 %v225, %v225
        %v228 = vmul.f32 %v226, %v226
        %v229 = vld [vmem:[%s191] sm:$0x3]
        %vm230 = vcmp.eq.s32.totalorder %v229, 0
        %vm231 = vcmp.eq.s32.totalorder %v229, 1
        %v232 = vsel %vm230, %v225, 0.0
        %v233 = vsel %vm231, %v226, 0.0
        %v234 = vsel %vm230, 1.0, 0.0
        %v235 = vsel %vm231, 1.0, 0.0
        %v236 = vadd.f32 %v227, %v234
        %v237 = vadd.f32 %v228, %v235
        %v238 = vld [vmem:[#allocation2] sm:$0x1]
        %v239 = vld [vmem:[#allocation2 + $0x1] sm:$0x1]
        %vm240 = vcmask 1041408
        %v241 = vsel %vm240, %v232, 0.0
        %v242 = vrot.slane %v241, 4
        %v243 = vadd.f32 %v241, %v242
        %v244 = vrot.slane %v243, 2
        %v245 = vadd.f32 %v243, %v244
        %v246 = vrot.slane %v245, 1
        %v247 = vadd.f32 %v245, %v246
        %v248 = vsel %vm240, %v233, 0.0
        %v249 = vrot.slane %v248, 4
        %v250 = vadd.f32 %v248, %v249
        %v251 = vrot.slane %v250, 2
        %v252 = vadd.f32 %v250, %v251
        %v253 = vrot.slane %v252, 1
        %v254 = vadd.f32 %v252, %v253
        %v255 = vadd.f32 %v238, %v247
        %v256 = vadd.f32 %v239, %v254
        %257 = vst [vmem:[#allocation2] sm:$0x1] %v255
        %258 = vst [vmem:[#allocation2 + $0x1] sm:$0x1] %v256
        %v259 = vld [vmem:[#allocation3] sm:$0x1]
        %v260 = vld [vmem:[#allocation3 + $0x1] sm:$0x1]
        %v261 = vsel %vm240, %v236, 0.0
        %v262 = vrot.slane %v261, 4
        %v263 = vadd.f32 %v261, %v262
        %v264 = vrot.slane %v263, 2
        %v265 = vadd.f32 %v263, %v264
        %v266 = vrot.slane %v265, 1
        %v267 = vadd.f32 %v265, %v266
        %v268 = vsel %vm240, %v237, 0.0
        %v269 = vrot.slane %v268, 4
        %v270 = vadd.f32 %v268, %v269
        %v271 = vrot.slane %v270, 2
        %v272 = vadd.f32 %v270, %v271
        %v273 = vrot.slane %v272, 1
        %v274 = vadd.f32 %v272, %v273
        %v275 = vadd.f32 %v259, %v267
        %v276 = vadd.f32 %v260, %v274
        %277 = vst [vmem:[#allocation3] sm:$0x1] %v275
        %278 = vst [vmem:[#allocation3 + $0x1] sm:$0x1] %v276
        // Predicated region
        $region41: #{tpu_custom_call.1} parent=27 // pred_check
          %p279 = pneg %p217
        $region42: #{tpu_custom_call.1} parent=27 // pred_check_branch
          %281 = sbr.rel (%p279) target = $region44
        $region43: #{tpu_custom_call.1} parent=27 // pred_region
          %v282 = vld [vmem:[#allocation2] sm:$0x1]
          %v283 = vld [vmem:[#allocation2 + $0x1] sm:$0x1]
          %v284 = vadd.f32 %v282, 0.0
          %v285 = vadd.f32 %v283, 0.0
          %v288 = vcombine.low %v284, %v285
          %v290 = vunpack.c.l.s4 1966171168
          %v291 = vunpack.c.0.s8 %v290
          %v292 = vlaneseq
          %v293 = vshrl.u32 %v292, 7
          %v294 = vsub.s32 %v291, %v293
          %v295 = vrot.slane %v288, %v294
          %v297 = vunpack.c.l.s4 1966171168
          %v298 = vunpack.c.0.s8 %v297
          %v299 = vlaneseq
          %v300 = vshrl.u32 %v299, 7
          %v301 = vsub.s32 %v298, %v300
          %v302 = vrot.slane %v295, %v301
          %304 = vst [vmem:[%s216] sm:$0x3] %v302
          %v305 = vld [vmem:[#allocation3] sm:$0x1]
          %v306 = vld [vmem:[#allocation3 + $0x1] sm:$0x1]
          %v307 = vadd.f32 %v305, 0.0
          %v308 = vadd.f32 %v306, 0.0
          %v311 = vcombine.low %v307, %v308
          %v313 = vunpack.c.l.s4 1966171168
          %v314 = vunpack.c.0.s8 %v313
          %v315 = vlaneseq
          %v316 = vshrl.u32 %v315, 7
          %v317 = vsub.s32 %v314, %v316
          %v318 = vrot.slane %v311, %v317
          %v320 = vunpack.c.l.s4 1966171168
          %v321 = vunpack.c.0.s8 %v320
          %v322 = vlaneseq
          %v323 = vshrl.u32 %v322, 7
          %v324 = vsub.s32 %v321, %v323
          %v325 = vrot.slane %v318, %v324
          %s327 = scalar_lea.vmem %s216, 2 [#allocation9]
          %328 = vst [vmem:[%s327] sm:$0x3] %v325
        $region44: #{tpu_custom_call.1} parent=27 // pred_fallthru
          _
        %s329 = sand.u32 %s98, 1
        %s330 = scalar_lea.sflag [#allocation6], %s329
        %s331 = sand.u32 %s98, 1
        %s332 = smul.addr %s331, 4
        %s333 = scalar_lea.vmem [#allocation9], %s332
        // Predicated region
        $region45: #{tpu_custom_call.1} parent=27 // pred_check
          %p334 = pneg %p108
        $region46: #{tpu_custom_call.1} parent=27 // pred_check_branch
          %336 = sbr.rel (%p334) target = $region48
        $region47: #{tpu_custom_call.1} parent=27 // pred_region
          %s338 = ssub.s32 64, 64
          %339 = vsyncadd %s330, %s338
          %s340 = smul.addr %s26, 2
          %s341 = smul.addr %s340, 32
          %s342 = scalar_lea.hbm %s2, %s341
          %s343 = sshll.u32 %s333, 4
          %s344 = int_to_ptr.vmem [resolvable:$true] %s343
          %349 = dma.vmem_to_hbm [thread:$0]  %s344, 64, %s342, %s330, 32, 32, 2
        $region48: #{tpu_custom_call.1} parent=27 // pred_fallthru
          _
      $region28: #{tpu_custom_call.1} parent=5 // pred_fallthru
        _
      %p350 = scmp.le.s32.totalorder 2, %s17
      // Predicated region
      $region49: #{tpu_custom_call.1} parent=5 // pred_check
        %p351 = pneg %p350
      $region50: #{tpu_custom_call.1} parent=5 // pred_check_branch
        %353 = sbr.rel (%p351) target = $region52
      $region51: #{tpu_custom_call.1} parent=5 // pred_region
        %s354 = ssub.s32 %s17, 2
        // Predicated region
        $region53: #{tpu_custom_call.1} parent=51 // pred_check
          %p355 = pneg %p114
        $region54: #{tpu_custom_call.1} parent=51 // pred_check_branch
          %357 = sbr.rel (%p355) target = $region56
        $region55: #{tpu_custom_call.1} parent=51 // pred_region
          %s358 = sand.u32 %s99, 1
          %s359 = scalar_lea.sflag [#allocation6], %s358
          %s360 = sand.u32 %s99, 1
          %s361 = smul.addr %s360, 4
          %s362 = scalar_lea.vmem [#allocation9], %s361
          %363 = dma.done %s359, 64
        $region56: #{tpu_custom_call.1} parent=51 // pred_fallthru
          _
      $region52: #{tpu_custom_call.1} parent=5 // pred_fallthru
        _
    $region6: #{tpu_custom_call.1} parent=1 // loop_footer
      %s21 = sadd.s32 1, %s17
    $region7: #{tpu_custom_call.1} parent=1 // loop_footer_branch
      %16 = sbr.rel target = $region3
    $region8: #{tpu_custom_call.1} parent=1 // loop_exit
      _
    %364 = vsyncpa [#allocation5], 1
    %s365 = scalar_lea.sflag [#allocation5], 1
    %366 = vsyncpa %s365, 1
    %367 = vsyncpa [#allocation8], 1
    %s368 = scalar_lea.sflag [#allocation8], 1
    %369 = vsyncpa %s368, 1
    %370 = vsyncpa [#allocation6], 1
    %s371 = scalar_lea.sflag [#allocation6], 1
    %372 = vsyncpa %s371, 1

</llo_original>
